<compile_context>
chip_gen: v7x
topology: tpu7x:2x2x1
jax: 0.10.0
libtpu: 0.0.40
codegen_flags: <defaults>
</compile_context>

<pallas_src>
import functools

import jax
import jax.numpy as jnp
from jax.experimental import pallas as pl
from jax.experimental.pallas import tpu as pltpu


def _round_up(x, m):
    return ((x + m - 1) // m) * m


def _cdiv(a, b):
    return (a + b - 1) // b


# ----------------------------------------------------------------------------
# Kernel: fc linear layer,  out[tm, E] = hidden[tm, 768] @ W[768, E] + b[E]
# ----------------------------------------------------------------------------
def _fc_kernel(h_ref, w_ref, b_ref, o_ref):
    # Cast f32 -> bf16 in VMEM (free VPU op, hidden under the HBM DMA); MXU
    # accumulates in f32 via preferred_element_type.
    h = h_ref[...].astype(jnp.bfloat16)
    acc = jnp.dot(h, w_ref[...], preferred_element_type=jnp.float32)
    o_ref[...] = (acc + b_ref[...]).astype(o_ref.dtype)


def _pick_tm(M, *, tm_max=2048, min_tm=256, target_steps=8):
    """Row-tile size: single block for tiny M, otherwise aim for >= target_steps
    grid steps (megacore + pipeline depth) capped at tm_max rows."""
    if M <= min_tm:
        return _round_up(max(M, 1), 8)
    tm = _round_up(_cdiv(M, target_steps), min_tm)
    return int(min(tm, tm_max))


def fc_forward(hidden, weight_bf16_t, bias_2d, *, tm=None):
    """hidden: [M, H] f32, weight_bf16_t: [H, E] bf16, bias_2d: [1, E] f32 -> [M, E] f32."""
    M, H = hidden.shape
    H_w, E = weight_bf16_t.shape
    assert H == H_w
    assert H % 128 == 0, "hidden size must be lane-aligned"

    tm_eff = _pick_tm(M) if tm is None else tm
    grid = (_cdiv(M, tm_eff),)

    # VMEM budget: double-buffered f32 hidden tile + f32 out tile, resident
    # bf16 weight + f32 bias (x2 buffers), with headroom, clamped v7x-safe.
    vmem_need = (
        2 * tm_eff * (H * 4 + E * 4)          # hidden tile + out tile, double-buffered
        + 2 * (H * E * 2 + E * 4)             # weight (bf16) + bias (f32)
    )
    vmem_limit = int(min(max(int(1.25 * vmem_need) + (4 << 20), 16 << 20), 48 << 20))

    out = pl.pallas_call(
        _fc_kernel,
        out_shape=jax.ShapeDtypeStruct((M, E), jnp.float32),
        grid=grid,
        in_specs=[
            pl.BlockSpec((tm_eff, H), lambda i: (i, 0)),   # stream hidden rows (f32)
            pl.BlockSpec((H, E), lambda i: (0, 0)),        # weight resident (bf16)
            pl.BlockSpec((1, E), lambda i: (0, 0)),        # bias resident (f32)
        ],
        out_specs=pl.BlockSpec((tm_eff, E), lambda i: (i, 0)),
        compiler_params=pltpu.CompilerParams(
            dimension_semantics=("parallel",),
            vmem_limit_bytes=vmem_limit,
        ),
    )(hidden, weight_bf16_t, bias_2d)
    return out


# ----------------------------------------------------------------------------
# Jitted forward (weights passed as arguments — not baked in as constants)
# ----------------------------------------------------------------------------
@jax.jit
def _encoder_forward(last_hidden_state, attention_mask, weight_bf16_t, bias_2d):
    B, S, H = last_hidden_state.shape
    E = weight_bf16_t.shape[1]
    hidden_2d = last_hidden_state.reshape(B * S, H)
    out_2d = fc_forward(hidden_2d, weight_bf16_t, bias_2d)
    out = out_2d.reshape(B, S, E)
    # lengths: tiny int32 reduction — plain JAX is strictly cheaper than a
    # separate pallas_call.  Returned as a device array; callers that need a
    # python list convert outside the hot path.
    lengths = jnp.sum(attention_mask.astype(jnp.int32), axis=1)
    return out, lengths


# ----------------------------------------------------------------------------
# Module wrapper
# ----------------------------------------------------------------------------
class EncoderWordBertDistilPallas:
    def __init__(self, embed_size, key):
        self.in_features = 768
        self.embed_size = embed_size
        # Xavier uniform init, matching init_weights():
        #   r = sqrt(6) / sqrt(in_features + out_features); bias = 0.
        r = jnp.sqrt(6.0) / jnp.sqrt(self.in_features + self.embed_size)
        # PyTorch weight is [E, 768]; store transposed [768, E] for the kernel.
        w = jax.random.uniform(
            key, (self.embed_size, self.in_features),
            minval=-r, maxval=r, dtype=jnp.float32,
        )
        self.weight_t = jnp.transpose(w)                              # [768, E] f32 (reference)
        self.weight_bf16_t = self.weight_t.astype(jnp.bfloat16)       # pre-cast once
        self.bias_2d = jnp.zeros((1, self.embed_size), jnp.float32)   # pre-shaped once

    def __call__(self, last_hidden_state, attention_mask):
        """last_hidden_state: [B, S, 768] f32, attention_mask: [B, S] int32.
        Returns (out [B, S, E] f32, lengths [B] int32 device array)."""
        return _encoder_forward(
            last_hidden_state, attention_mask, self.weight_bf16_t, self.bias_2d
        )


if __name__ == "__main__":
    key = jax.random.PRNGKey(0)
    k_hid, k_fc = jax.random.split(key)

    B, S, H, E = 2, 8, 768, 32

    # Synthetic "last hidden state" standing in for the frozen DistilBERT output.
    hidden = jax.random.normal(k_hid, (B, S, H), dtype=jnp.float32)
    # Attention mask: first sequence full length 8, second length 5.
    attn_mask = jnp.array(
        [[1] * 8,
         [1] * 5 + [0] * 3],
        dtype=jnp.int32,
    )

    enc = EncoderWordBertDistilPallas(embed_size=E, key=k_fc)
    out, lengths = enc(hidden, attn_mask)
    out = jax.block_until_ready(out)

    # Reference check against plain JAX with the same bf16-in / f32-acc recipe.
    h_bf = hidden.reshape(B * S, H).astype(jnp.bfloat16)
    w_bf = enc.weight_bf16_t
    ref = (
        jnp.dot(h_bf, w_bf, preferred_element_type=jnp.float32) + enc.bias_2d
    ).reshape(B, S, E)
    assert out.shape == (B, S, E)
    assert jnp.allclose(out, ref, atol=1e-2, rtol=1e-2)

    # Host conversion happens outside the kernel/forward hot path.
    assert [int(v) for v in jax.device_get(lengths)] == [8, 5]

    print("KERNEL_OK")
</pallas_src>

<mosaic_0001>
module attributes {stable_mosaic.version = 11 : i64} {
  func.func @_fc_kernel(%arg0: i32, %arg1: memref<16x768xf32, #tpu.memory_space<vmem>>, %arg2: memref<768x32xbf16, #tpu.memory_space<vmem>>, %arg3: memref<1x32xf32, #tpu.memory_space<vmem>>, %arg4: memref<16x32xf32, #tpu.memory_space<vmem>>) attributes {dimension_semantics = [#tpu.dimension_semantics<parallel>], iteration_bounds = array<i64: 1>, scalar_prefetch = 0 : i64, scratch_operands = 0 : i64, tpu.core_type = #tpu.core_type<tc>, window_params = [{transform_indices = @transform_0, window_bounds = array<i64: 16, 768>}, {pipeline_mode = #tpu.pipeline_mode<synchronous>, transform_indices = @transform_1, window_bounds = array<i64: 768, 32>}, {pipeline_mode = #tpu.pipeline_mode<synchronous>, transform_indices = @transform_2, window_bounds = array<i64: 1, 32>}, {transform_indices = @transform_3, window_bounds = array<i64: 16, 32>}]} {
    %c0 = arith.constant 0 : index
    %c0_0 = arith.constant 0 : index
    %0 = vector.load %arg1[%c0, %c0_0] : memref<16x768xf32, #tpu.memory_space<vmem>>, vector<16x768xf32>
    %1 = arith.truncf %0 : vector<16x768xf32> to vector<16x768xbf16>
    %c0_1 = arith.constant 0 : index
    %c0_2 = arith.constant 0 : index
    %2 = vector.load %arg2[%c0_1, %c0_2] : memref<768x32xbf16, #tpu.memory_space<vmem>>, vector<768x32xbf16>
    %cst = arith.constant dense<0.000000e+00> : vector<16x32xf32>
    %3 = tpu.matmul %1, %2, %cst {dimension_numbers = #tpu.dot_dimension_numbers<[1], [0], [0], [1], [0, 0, 1, 1], [], []>} : vector<16x768xbf16>, vector<768x32xbf16>, vector<16x32xf32> -> vector<16x32xf32>
    %c0_3 = arith.constant 0 : index
    %c0_4 = arith.constant 0 : index
    %4 = vector.load %arg3[%c0_3, %c0_4] : memref<1x32xf32, #tpu.memory_space<vmem>>, vector<1x32xf32>
    %5 = vector.broadcast %4 : vector<1x32xf32> to vector<16x32xf32>
    %6 = arith.addf %3, %5 : vector<16x32xf32>
    %c0_5 = arith.constant 0 : index
    %c0_6 = arith.constant 0 : index
    %7 = vector.load %arg4[%c0_5, %c0_6] : memref<16x32xf32, #tpu.memory_space<vmem>>, vector<16x32xf32>
    tpu.vector_store %arg4[%c0_5, %c0_6], %6 {strides = array<i32>} : memref<16x32xf32, #tpu.memory_space<vmem>>, vector<16x32xf32>,
    return
  }
  func.func @transform_0(%arg0: i32) -> (i32, i32) {
    %c0_i32 = arith.constant 0 : i32
    %c0_i32_0 = arith.constant 0 : i32
    return %arg0, %c0_i32 : i32, i32
  }
  func.func @transform_1(%arg0: i32) -> (i32, i32) {
    %c0_i32 = arith.constant 0 : i32
    %c0_i32_0 = arith.constant 0 : i32
    %c0_i32_1 = arith.constant 0 : i32
    return %c0_i32, %c0_i32_0 : i32, i32
  }
  func.func @transform_2(%arg0: i32) -> (i32, i32) {
    %c0_i32 = arith.constant 0 : i32
    %c0_i32_0 = arith.constant 0 : i32
    %c0_i32_1 = arith.constant 0 : i32
    return %c0_i32, %c0_i32_0 : i32, i32
  }
  func.func @transform_3(%arg0: i32) -> (i32, i32) {
    %c0_i32 = arith.constant 0 : i32
    %c0_i32_0 = arith.constant 0 : i32
    return %arg0, %c0_i32 : i32, i32
  }
}

</mosaic_0001>

<llo_original>
// kernel: _encoder_forward.1
$region0: #{_encoder_forward.1}
  #allocation0 [shape = 'u32[]', space=smem, size = 0x4, offset = 0x4, fixed_abs, tag = 'smem constant byte address 0x4 - core index']
  #allocation1 [shape = 'u32[144,128]{1,0:T(1,128)}', space=vmem, size = 0x12000, scoped, tag = 'internal scratch']
  %s0 = inlined_call_operand.vmem [shape: f32[16,768], index: 0, kind: input, shape index: {}]
  %s1 = inlined_call_operand.vmem [shape: bf16[768,32], index: 1, kind: input, shape index: {}]
  %s2 = inlined_call_operand.vmem [shape: f32[1,32], index: 2, kind: input, shape index: {}]
  %s3 = inlined_call_operand.hbm [shape: f32[16,32], index: 3, kind: output, shape index: {}]
  %s4 = sld [smem:[#allocation0]]
  $region22: #{_encoder_forward.1} parent=0
    _
  %s6 = ssub.s32 1, %s4
  %s7 = scalar_select 0, %s6, %s4
  $region1: #{_encoder_forward.1} parent=0
    #allocation2 [shape = 'u8[8192]{0}', space=vmem, size = 0x2000, scoped, tag = 'output window, operand 0, single buffered']
    #allocation3 [shape = 's32[1]{0}', space=sflag, size = 0x4, scoped, tag = 'scoped memory for _encoder_forward.1']
    %8 = vsyncpa [#allocation3], 0
    // Predicated region
    $region2: #{_encoder_forward.1} parent=1 // pred_check
      _
    $region3: #{_encoder_forward.1} parent=1 // pred_check_branch
      %10 = sbr.rel (0) target = $region5
    $region4: #{_encoder_forward.1} parent=1 // pred_region
      _
    $region5: #{_encoder_forward.1} parent=1 // pred_fallthru
      _
    // Predicated region
    $region6: #{_encoder_forward.1} parent=1 // pred_check
      _
    $region7: #{_encoder_forward.1} parent=1 // pred_check_branch
      %12 = sbr.rel (0) target = $region9
    $region8: #{_encoder_forward.1} parent=1 // pred_region
      _
    $region9: #{_encoder_forward.1} parent=1 // pred_fallthru
      _
    // Predicated region
    $region10: #{_encoder_forward.1} parent=1 // pred_check
      _
    $region11: #{_encoder_forward.1} parent=1 // pred_check_branch
      %14 = sbr.rel (0) target = $region13
    $region12: #{_encoder_forward.1} parent=1 // pred_region
      _
    $region13: #{_encoder_forward.1} parent=1 // pred_fallthru
      _
    %v16 = vld [vmem:[%s0] sm:$0xff]
    %v17 = vld [vmem:[%s0 + $0x8] sm:$0xff]
    %v18 = vld [vmem:[%s0 + $0x10] sm:$0xff]
    %v19 = vld [vmem:[%s0 + $0x18] sm:$0xff]
    %v20 = vld [vmem:[%s0 + $0x20] sm:$0xff]
    %v21 = vld [vmem:[%s0 + $0x28] sm:$0xff]
    %v22 = vld [vmem:[%s0 + $0x30] sm:$0xff]
    %v23 = vld [vmem:[%s0 + $0x38] sm:$0xff]
    %v24 = vld [vmem:[%s0 + $0x40] sm:$0xff]
    %v25 = vld [vmem:[%s0 + $0x48] sm:$0xff]
    %v26 = vld [vmem:[%s0 + $0x50] sm:$0xff]
    %v27 = vld [vmem:[%s0 + $0x58] sm:$0xff]
    %v28 = vpack.c.bf16 %v22, %v16
    %v29 = vpack.c.bf16 %v23, %v17
    %v30 = vpack.c.bf16 %v24, %v18
    %v31 = vpack.c.bf16 %v25, %v19
    %v32 = vpack.c.bf16 %v26, %v20
    %v33 = vpack.c.bf16 %v27, %v21
    %v34 = vld [vmem:[%s1] sm:$0xf]
    %v35 = vld [vmem:[%s1 + $0x4] sm:$0xf]
    %v36 = vld [vmem:[%s1 + $0x8] sm:$0xf]
    %v37 = vld [vmem:[%s1 + $0xc] sm:$0xf]
    %v38 = vld [vmem:[%s1 + $0x10] sm:$0xf]
    %v39 = vld [vmem:[%s1 + $0x14] sm:$0xf]
    %v40 = vld [vmem:[%s1 + $0x18] sm:$0xf]
    %v41 = vld [vmem:[%s1 + $0x1c] sm:$0xf]
    %v42 = vld [vmem:[%s1 + $0x20] sm:$0xf]
    %v43 = vld [vmem:[%s1 + $0x24] sm:$0xf]
    %v44 = vld [vmem:[%s1 + $0x28] sm:$0xf]
    %v45 = vld [vmem:[%s1 + $0x2c] sm:$0xf]
    %v46 = vld [vmem:[%s1 + $0x30] sm:$0xf]
    %v47 = vld [vmem:[%s1 + $0x34] sm:$0xf]
    %v48 = vld [vmem:[%s1 + $0x38] sm:$0xf]
    %v49 = vld [vmem:[%s1 + $0x3c] sm:$0xf]
    %v50 = vld [vmem:[%s1 + $0x40] sm:$0xf]
    %v51 = vld [vmem:[%s1 + $0x44] sm:$0xf]
    %v52 = vld [vmem:[%s1 + $0x48] sm:$0xf]
    %v53 = vld [vmem:[%s1 + $0x4c] sm:$0xf]
    %v54 = vld [vmem:[%s1 + $0x50] sm:$0xf]
    %v55 = vld [vmem:[%s1 + $0x54] sm:$0xf]
    %v56 = vld [vmem:[%s1 + $0x58] sm:$0xf]
    %v57 = vld [vmem:[%s1 + $0x5c] sm:$0xf]
    %v58 = vld [vmem:[%s1 + $0x60] sm:$0xf]
    %v59 = vld [vmem:[%s1 + $0x64] sm:$0xf]
    %v60 = vld [vmem:[%s1 + $0x68] sm:$0xf]
    %v61 = vld [vmem:[%s1 + $0x6c] sm:$0xf]
    %v62 = vld [vmem:[%s1 + $0x70] sm:$0xf]
    %v63 = vld [vmem:[%s1 + $0x74] sm:$0xf]
    %v64 = vld [vmem:[%s1 + $0x78] sm:$0xf]
    %v65 = vld [vmem:[%s1 + $0x7c] sm:$0xf]
    %v66 = vld [vmem:[%s1 + $0x80] sm:$0xf]
    %v67 = vld [vmem:[%s1 + $0x84] sm:$0xf]
    %v68 = vld [vmem:[%s1 + $0x88] sm:$0xf]
    %v69 = vld [vmem:[%s1 + $0x8c] sm:$0xf]
    %v70 = vld [vmem:[%s1 + $0x90] sm:$0xf]
    %v71 = vld [vmem:[%s1 + $0x94] sm:$0xf]
    %v72 = vld [vmem:[%s1 + $0x98] sm:$0xf]
    %v73 = vld [vmem:[%s1 + $0x9c] sm:$0xf]
    %v74 = vld [vmem:[%s1 + $0xa0] sm:$0xf]
    %v75 = vld [vmem:[%s1 + $0xa4] sm:$0xf]
    %v76 = vld [vmem:[%s1 + $0xa8] sm:$0xf]
    %v77 = vld [vmem:[%s1 + $0xac] sm:$0xf]
    %v78 = vld [vmem:[%s1 + $0xb0] sm:$0xf]
    %v79 = vld [vmem:[%s1 + $0xb4] sm:$0xf]
    %v80 = vld [vmem:[%s1 + $0xb8] sm:$0xf]
    %v81 = vld [vmem:[%s1 + $0xbc] sm:$0xf]
    %v82 = vld [vmem:[%s1 + $0xc0] sm:$0xf]
    %v83 = vld [vmem:[%s1 + $0xc4] sm:$0xf]
    %v84 = vld [vmem:[%s1 + $0xc8] sm:$0xf]
    %v85 = vld [vmem:[%s1 + $0xcc] sm:$0xf]
    %v86 = vld [vmem:[%s1 + $0xd0] sm:$0xf]
    %v87 = vld [vmem:[%s1 + $0xd4] sm:$0xf]
    %v88 = vld [vmem:[%s1 + $0xd8] sm:$0xf]
    %v89 = vld [vmem:[%s1 + $0xdc] sm:$0xf]
    %v90 = vld [vmem:[%s1 + $0xe0] sm:$0xf]
    %v91 = vld [vmem:[%s1 + $0xe4] sm:$0xf]
    %v92 = vld [vmem:[%s1 + $0xe8] sm:$0xf]
    %v93 = vld [vmem:[%s1 + $0xec] sm:$0xf]
    %v94 = vld [vmem:[%s1 + $0xf0] sm:$0xf]
    %v95 = vld [vmem:[%s1 + $0xf4] sm:$0xf]
    %v96 = vld [vmem:[%s1 + $0xf8] sm:$0xf]
    %v97 = vld [vmem:[%s1 + $0xfc] sm:$0xf]
    %v98 = vld [vmem:[%s1 + $0x100] sm:$0xf]
    %v99 = vld [vmem:[%s1 + $0x104] sm:$0xf]
    %v100 = vld [vmem:[%s1 + $0x108] sm:$0xf]
    %v101 = vld [vmem:[%s1 + $0x10c] sm:$0xf]
    %v102 = vld [vmem:[%s1 + $0x110] sm:$0xf]
    %v103 = vld [vmem:[%s1 + $0x114] sm:$0xf]
    %v104 = vld [vmem:[%s1 + $0x118] sm:$0xf]
    %v105 = vld [vmem:[%s1 + $0x11c] sm:$0xf]
    %v106 = vld [vmem:[%s1 + $0x120] sm:$0xf]
    %v107 = vld [vmem:[%s1 + $0x124] sm:$0xf]
    %v108 = vld [vmem:[%s1 + $0x128] sm:$0xf]
    %v109 = vld [vmem:[%s1 + $0x12c] sm:$0xf]
    %v110 = vld [vmem:[%s1 + $0x130] sm:$0xf]
    %v111 = vld [vmem:[%s1 + $0x134] sm:$0xf]
    %v112 = vld [vmem:[%s1 + $0x138] sm:$0xf]
    %v113 = vld [vmem:[%s1 + $0x13c] sm:$0xf]
    %v114 = vld [vmem:[%s1 + $0x140] sm:$0xf]
    %v115 = vld [vmem:[%s1 + $0x144] sm:$0xf]
    %v116 = vld [vmem:[%s1 + $0x148] sm:$0xf]
    %v117 = vld [vmem:[%s1 + $0x14c] sm:$0xf]
    %v118 = vld [vmem:[%s1 + $0x150] sm:$0xf]
    %v119 = vld [vmem:[%s1 + $0x154] sm:$0xf]
    %v120 = vld [vmem:[%s1 + $0x158] sm:$0xf]
    %v121 = vld [vmem:[%s1 + $0x15c] sm:$0xf]
    %v122 = vld [vmem:[%s1 + $0x160] sm:$0xf]
    %v123 = vld [vmem:[%s1 + $0x164] sm:$0xf]
    %v124 = vld [vmem:[%s1 + $0x168] sm:$0xf]
    %v125 = vld [vmem:[%s1 + $0x16c] sm:$0xf]
    %v126 = vld [vmem:[%s1 + $0x170] sm:$0xf]
    %v127 = vld [vmem:[%s1 + $0x174] sm:$0xf]
    %v128 = vld [vmem:[%s1 + $0x178] sm:$0xf]
    %v129 = vld [vmem:[%s1 + $0x17c] sm:$0xf]
    %v130 = vld [vmem:[%s2] sm:$0x1]
    %v132 = vlaneseq
    %v133 = vshrl.u32 %v132, 7
    %v134 = vsub.s32 0, %v133
    %v135 = vrot.slane %v130, %v134
    %v233 = vunpack.c.l.b16 %v34
    %v234 = vunpack.c.l.b16 %v35
    %v235 = vunpack.c.l.b16 %v36
    %v236 = vunpack.c.l.b16 %v37
    %v237 = vunpack.c.l.b16 %v38
    %v238 = vunpack.c.l.b16 %v39
    %v239 = vunpack.c.l.b16 %v40
    %v240 = vunpack.c.l.b16 %v41
    %v241 = vunpack.c.l.b16 %v42
    %v242 = vunpack.c.l.b16 %v43
    %v243 = vunpack.c.l.b16 %v44
    %v244 = vunpack.c.l.b16 %v45
    %v245 = vunpack.c.l.b16 %v46
    %v246 = vunpack.c.l.b16 %v47
    %v247 = vunpack.c.l.b16 %v48
    %v248 = vunpack.c.l.b16 %v49
    %v249 = vunpack.c.l.b16 %v50
    %v250 = vunpack.c.l.b16 %v51
    %v251 = vunpack.c.l.b16 %v52
    %v252 = vunpack.c.l.b16 %v53
    %v253 = vunpack.c.l.b16 %v54
    %v254 = vunpack.c.l.b16 %v55
    %v255 = vunpack.c.l.b16 %v56
    %v256 = vunpack.c.l.b16 %v57
    %v257 = vunpack.c.l.b16 %v58
    %v258 = vunpack.c.l.b16 %v59
    %v259 = vunpack.c.l.b16 %v60
    %v260 = vunpack.c.l.b16 %v61
    %v261 = vunpack.c.l.b16 %v62
    %v262 = vunpack.c.l.b16 %v63
    %v263 = vunpack.c.l.b16 %v64
    %v264 = vunpack.c.l.b16 %v65
    %v265 = vunpack.c.l.b16 %v66
    %v266 = vunpack.c.l.b16 %v67
    %v267 = vunpack.c.l.b16 %v68
    %v268 = vunpack.c.l.b16 %v69
    %v269 = vunpack.c.l.b16 %v70
    %v270 = vunpack.c.l.b16 %v71
    %v271 = vunpack.c.l.b16 %v72
    %v272 = vunpack.c.l.b16 %v73
    %v273 = vunpack.c.l.b16 %v74
    %v274 = vunpack.c.l.b16 %v75
    %v275 = vunpack.c.l.b16 %v76
    %v276 = vunpack.c.l.b16 %v77
    %v277 = vunpack.c.l.b16 %v78
    %v278 = vunpack.c.l.b16 %v79
    %v279 = vunpack.c.l.b16 %v80
    %v280 = vunpack.c.l.b16 %v81
    %v281 = vunpack.c.l.b16 %v82
    %v282 = vunpack.c.l.b16 %v83
    %v283 = vunpack.c.l.b16 %v84
    %v284 = vunpack.c.l.b16 %v85
    %v285 = vunpack.c.l.b16 %v86
    %v286 = vunpack.c.l.b16 %v87
    %v287 = vunpack.c.l.b16 %v88
    %v288 = vunpack.c.l.b16 %v89
    %v289 = vunpack.c.l.b16 %v90
    %v290 = vunpack.c.l.b16 %v91
    %v291 = vunpack.c.l.b16 %v92
    %v292 = vunpack.c.l.b16 %v93
    %v293 = vunpack.c.l.b16 %v94
    %v294 = vunpack.c.l.b16 %v95
    %v295 = vunpack.c.l.b16 %v96
    %v296 = vunpack.c.l.b16 %v97
    %v297 = vunpack.c.l.b16 %v98
    %v298 = vunpack.c.l.b16 %v99
    %v299 = vunpack.c.l.b16 %v100
    %v300 = vunpack.c.l.b16 %v101
    %v301 = vunpack.c.l.b16 %v102
    %v302 = vunpack.c.l.b16 %v103
    %v303 = vunpack.c.l.b16 %v104
    %v304 = vunpack.c.l.b16 %v105
    %v305 = vunpack.c.l.b16 %v106
    %v306 = vunpack.c.l.b16 %v107
    %v307 = vunpack.c.l.b16 %v108
    %v308 = vunpack.c.l.b16 %v109
    %v309 = vunpack.c.l.b16 %v110
    %v310 = vunpack.c.l.b16 %v111
    %v311 = vunpack.c.l.b16 %v112
    %v312 = vunpack.c.l.b16 %v113
    %v313 = vunpack.c.l.b16 %v114
    %v314 = vunpack.c.l.b16 %v115
    %v315 = vunpack.c.l.b16 %v116
    %v316 = vunpack.c.l.b16 %v117
    %v317 = vunpack.c.l.b16 %v118
    %v318 = vunpack.c.l.b16 %v119
    %v319 = vunpack.c.l.b16 %v120
    %v320 = vunpack.c.l.b16 %v121
    %v321 = vunpack.c.l.b16 %v122
    %v322 = vunpack.c.l.b16 %v123
    %v323 = vunpack.c.l.b16 %v124
    %v324 = vunpack.c.l.b16 %v125
    %v325 = vunpack.c.l.b16 %v126
    %v326 = vunpack.c.l.b16 %v127
    %v327 = vunpack.c.l.b16 %v128
    %v328 = vunpack.c.l.b16 %v129
    %v329 = vpack.c.b16 %v234, %v233
    %v330 = vpack.c.b16 %v236, %v235
    %v331 = vpack.c.b16 %v238, %v237
    %v332 = vpack.c.b16 %v240, %v239
    %v333 = vpack.c.b16 %v242, %v241
    %v334 = vpack.c.b16 %v244, %v243
    %v335 = vpack.c.b16 %v246, %v245
    %v336 = vpack.c.b16 %v248, %v247
    %v337 = vpack.c.b16 %v250, %v249
    %v338 = vpack.c.b16 %v252, %v251
    %v339 = vpack.c.b16 %v254, %v253
    %v340 = vpack.c.b16 %v256, %v255
    %v341 = vpack.c.b16 %v258, %v257
    %v342 = vpack.c.b16 %v260, %v259
    %v343 = vpack.c.b16 %v262, %v261
    %v344 = vpack.c.b16 %v264, %v263
    %v345 = vpack.c.b16 %v266, %v265
    %v346 = vpack.c.b16 %v268, %v267
    %v347 = vpack.c.b16 %v270, %v269
    %v348 = vpack.c.b16 %v272, %v271
    %v349 = vpack.c.b16 %v274, %v273
    %v350 = vpack.c.b16 %v276, %v275
    %v351 = vpack.c.b16 %v278, %v277
    %v352 = vpack.c.b16 %v280, %v279
    %v353 = vpack.c.b16 %v282, %v281
    %v354 = vpack.c.b16 %v284, %v283
    %v355 = vpack.c.b16 %v286, %v285
    %v356 = vpack.c.b16 %v288, %v287
    %v357 = vpack.c.b16 %v290, %v289
    %v358 = vpack.c.b16 %v292, %v291
    %v359 = vpack.c.b16 %v294, %v293
    %v360 = vpack.c.b16 %v296, %v295
    %v361 = vpack.c.b16 %v298, %v297
    %v362 = vpack.c.b16 %v300, %v299
    %v363 = vpack.c.b16 %v302, %v301
    %v364 = vpack.c.b16 %v304, %v303
    %v365 = vpack.c.b16 %v306, %v305
    %v366 = vpack.c.b16 %v308, %v307
    %v367 = vpack.c.b16 %v310, %v309
    %v368 = vpack.c.b16 %v312, %v311
    %v369 = vpack.c.b16 %v314, %v313
    %v370 = vpack.c.b16 %v316, %v315
    %v371 = vpack.c.b16 %v318, %v317
    %v372 = vpack.c.b16 %v320, %v319
    %v373 = vpack.c.b16 %v322, %v321
    %v374 = vpack.c.b16 %v324, %v323
    %v375 = vpack.c.b16 %v326, %v325
    %v376 = vpack.c.b16 %v328, %v327
    %425 = vmatprep.subr.bf16.mxu0 0
    %426 = vmatpush1.bf16.msra.mxu0 %v329
    %427 = vmatprep.subr.bf16.mxu0 0
    %428 = vmatpush1.bf16.msra.mxu0 %v330
    %429 = vmatprep.subr.bf16.mxu0 0
    %430 = vmatpush1.bf16.msra.mxu0 %v331
    %431 = vmatprep.subr.bf16.mxu0 0
    %432 = vmatpush1.bf16.msra.mxu0 %v332
    %433 = vmatprep.subr.bf16.mxu0 0
    %434 = vmatpush1.bf16.msra.mxu0 %v333
    %435 = vmatprep.subr.bf16.mxu0 0
    %436 = vmatpush1.bf16.msra.mxu0 %v334
    %437 = vmatprep.subr.bf16.mxu0 0
    %438 = vmatpush1.bf16.msra.mxu0 %v335
    %439 = vmatprep.subr.bf16.mxu0 0
    %440 = vmatpush1.bf16.msra.mxu0 %v336
    %441 = vmatprep.subr.bf16.mxu0 0
    %442 = vmatpush1.bf16.msra.mxu0 %v337
    %443 = vmatprep.subr.bf16.mxu0 0
    %444 = vmatpush1.bf16.msra.mxu0 %v338
    %445 = vmatprep.subr.bf16.mxu0 0
    %446 = vmatpush1.bf16.msra.mxu0 %v339
    %447 = vmatprep.subr.bf16.mxu0 0
    %448 = vmatpush1.bf16.msra.mxu0 %v340
    %449 = vmatprep.subr.bf16.mxu0 0
    %450 = vmatpush1.bf16.msra.mxu0 %v341
    %451 = vmatprep.subr.bf16.mxu0 0
    %452 = vmatpush1.bf16.msra.mxu0 %v342
    %453 = vmatprep.subr.bf16.mxu0 0
    %454 = vmatpush1.bf16.msra.mxu0 %v343
    %455 = vmatprep.subr.bf16.mxu0 0
    %456 = vmatpush1.bf16.msra.mxu0 %v344
    %457 = vmatprep.mubr.bf16.mxu0 %v29
    %458 = vmatmul.mubr.bf16.gmra.mrb[0].mxu0 %v28
    %v459 = vpop.f32.mrb[0].mxu0
    %v460 = vadd.f32 %v135, %v459
    %v461 = vpop.f32.mrb[0].mxu0
    %v462 = vpop.f32.mrb[0].mxu0
    %v463 = vadd.f32 %v135, %v462
    %v464 = vpop.f32.mrb[0].mxu0
    %465 = vdwg.mxu0
    %466 = vmatprep.subr.bf16.mxu0 0
    %467 = vmatpush1.bf16.msra.mxu0 %v345
    %468 = vmatprep.subr.bf16.mxu0 0
    %469 = vmatpush1.bf16.msra.mxu0 %v346
    %470 = vmatprep.subr.bf16.mxu0 0
    %471 = vmatpush1.bf16.msra.mxu0 %v347
    %472 = vmatprep.subr.bf16.mxu0 0
    %473 = vmatpush1.bf16.msra.mxu0 %v348
    %474 = vmatprep.subr.bf16.mxu0 0
    %475 = vmatpush1.bf16.msra.mxu0 %v349
    %476 = vmatprep.subr.bf16.mxu0 0
    %477 = vmatpush1.bf16.msra.mxu0 %v350
    %478 = vmatprep.subr.bf16.mxu0 0
    %479 = vmatpush1.bf16.msra.mxu0 %v351
    %480 = vmatprep.subr.bf16.mxu0 0
    %481 = vmatpush1.bf16.msra.mxu0 %v352
    %482 = vmatprep.subr.bf16.mxu0 0
    %483 = vmatpush1.bf16.msra.mxu0 %v353
    %484 = vmatprep.subr.bf16.mxu0 0
    %485 = vmatpush1.bf16.msra.mxu0 %v354
    %486 = vmatprep.subr.bf16.mxu0 0
    %487 = vmatpush1.bf16.msra.mxu0 %v355
    %488 = vmatprep.subr.bf16.mxu0 0
    %489 = vmatpush1.bf16.msra.mxu0 %v356
    %490 = vmatprep.subr.bf16.mxu0 0
    %491 = vmatpush1.bf16.msra.mxu0 %v357
    %492 = vmatprep.subr.bf16.mxu0 0
    %493 = vmatpush1.bf16.msra.mxu0 %v358
    %494 = vmatprep.subr.bf16.mxu0 0
    %495 = vmatpush1.bf16.msra.mxu0 %v359
    %496 = vmatprep.subr.bf16.mxu0 0
    %497 = vmatpush1.bf16.msra.mxu0 %v360
    %498 = vmatprep.mubr.bf16.mxu0 %v31
    %499 = vmatmul.mubr.bf16.gmra.mrb[0].mxu0 %v30
    %v500 = vpop.f32.mrb[0].mxu0
    %v501 = vadd.f32 %v460, %v500
    %v502 = vpop.f32.mrb[0].mxu0
    %v503 = vpop.f32.mrb[0].mxu0
    %v504 = vadd.f32 %v463, %v503
    %v505 = vpop.f32.mrb[0].mxu0
    %506 = vdwg.mxu0
    %507 = vmatprep.subr.bf16.mxu0 0
    %508 = vmatpush1.bf16.msra.mxu0 %v361
    %509 = vmatprep.subr.bf16.mxu0 0
    %510 = vmatpush1.bf16.msra.mxu0 %v362
    %511 = vmatprep.subr.bf16.mxu0 0
    %512 = vmatpush1.bf16.msra.mxu0 %v363
    %513 = vmatprep.subr.bf16.mxu0 0
    %514 = vmatpush1.bf16.msra.mxu0 %v364
    %515 = vmatprep.subr.bf16.mxu0 0
    %516 = vmatpush1.bf16.msra.mxu0 %v365
    %517 = vmatprep.subr.bf16.mxu0 0
    %518 = vmatpush1.bf16.msra.mxu0 %v366
    %519 = vmatprep.subr.bf16.mxu0 0
    %520 = vmatpush1.bf16.msra.mxu0 %v367
    %521 = vmatprep.subr.bf16.mxu0 0
    %522 = vmatpush1.bf16.msra.mxu0 %v368
    %523 = vmatprep.subr.bf16.mxu0 0
    %524 = vmatpush1.bf16.msra.mxu0 %v369
    %525 = vmatprep.subr.bf16.mxu0 0
    %526 = vmatpush1.bf16.msra.mxu0 %v370
    %527 = vmatprep.subr.bf16.mxu0 0
    %528 = vmatpush1.bf16.msra.mxu0 %v371
    %529 = vmatprep.subr.bf16.mxu0 0
    %530 = vmatpush1.bf16.msra.mxu0 %v372
    %531 = vmatprep.subr.bf16.mxu0 0
    %532 = vmatpush1.bf16.msra.mxu0 %v373
    %533 = vmatprep.subr.bf16.mxu0 0
    %534 = vmatpush1.bf16.msra.mxu0 %v374
    %535 = vmatprep.subr.bf16.mxu0 0
    %536 = vmatpush1.bf16.msra.mxu0 %v375
    %537 = vmatprep.subr.bf16.mxu0 0
    %538 = vmatpush1.bf16.msra.mxu0 %v376
    %539 = vmatprep.mubr.bf16.mxu0 %v33
    %540 = vmatmul.mubr.bf16.gmra.mrb[0].mxu0 %v32
    %v541 = vpop.f32.mrb[0].mxu0
    %v542 = vadd.f32 %v501, %v541
    %v543 = vpop.f32.mrb[0].mxu0
    %v544 = vpop.f32.mrb[0].mxu0
    %v545 = vadd.f32 %v504, %v544
    %v546 = vpop.f32.mrb[0].mxu0
    %547 = vdwg.mxu0
    %vm548 = vcmask 261120
    %549 = vst.msk [vmem:[#allocation2] sm:$0xff] %vm548, %v542
    %550 = vst.msk [vmem:[#allocation2 + $0x8] sm:$0xff] %vm548, %v545
    // Predicated region
    $region14: #{_encoder_forward.1} parent=1 // pred_check
      _
    $region15: #{_encoder_forward.1} parent=1 // pred_check_branch
      %552 = sbr.rel (0) target = $region17
    $region16: #{_encoder_forward.1} parent=1 // pred_region
      %s554 = ssub.s32 256, 256
      %555 = vsyncadd [#allocation3], %s554
      %s556 = sshll.u32 [#allocation2], 4
      %s557 = int_to_ptr.vmem [resolvable:$true] %s556
      %562 = dma.vmem_to_hbm [thread:$0]  %s557, 256, %s3, [#allocation3], 128, 128, 8
    $region17: #{_encoder_forward.1} parent=1 // pred_fallthru
      _
    // Predicated region
    $region18: #{_encoder_forward.1} parent=1 // pred_check
      _
    $region19: #{_encoder_forward.1} parent=1 // pred_check_branch
      %564 = sbr.rel (0) target = $region21
    $region20: #{_encoder_forward.1} parent=1 // pred_region
      %565 = dma.done [#allocation3], 256
    $region21: #{_encoder_forward.1} parent=1 // pred_fallthru
      _
    %566 = vsyncpa [#allocation3], 1

</llo_original>
